<compile_context>
chip_gen: v6e
topology: v6e:2x2x1
jax: 0.10.0
libtpu: 0.0.40
codegen_flags: <defaults>
</compile_context>

<pallas_src>
import functools

import jax
import jax.numpy as jnp
from jax.experimental import pallas as pl
from jax.experimental.pallas import tpu as pltpu


def _round_up(x, m):
    return -(-x // m) * m


def _wic_kernel(*refs, num_ins, W, compute_dtype):
    # refs: wn (SMEM), x_0..x_{num_ins-1}, halo_top, halo_bot, dwk, pww, pwb, out
    wn_ref = refs[0]
    x_refs = refs[1:1 + num_ins]
    ht_ref, hb_ref, dwk_ref, pww_ref, pwb_ref, o_ref = refs[1 + num_ins:]

    C, LT = x_refs[0].shape[1], x_refs[0].shape[2]     # LT = tile lanes (mult of 128)
    PAD = max(128, _round_up(W, 128))                  # lane-aligned halo chunk
    assert PAD >= W                                    # required by the wrap layout
    L = LT + 2 * PAD

    # ---- weighted input fusion (f32) + ReLU, then drop to compute dtype ----
    acc = wn_ref[0] * x_refs[0][0].astype(jnp.float32)          # (C, LT)
    top = wn_ref[0] * ht_ref[0, 0, 0].astype(jnp.float32)       # (C, W) row above tile
    bot = wn_ref[0] * hb_ref[0, 0, 0].astype(jnp.float32)       # (C, W) row below tile
    for k in range(1, num_ins):
        acc = acc + wn_ref[k] * x_refs[k][0].astype(jnp.float32)
        top = top + wn_ref[k] * ht_ref[k, 0, 0].astype(jnp.float32)
        bot = bot + wn_ref[k] * hb_ref[k, 0, 0].astype(jnp.float32)
    acc = jnp.maximum(acc, 0.0).astype(compute_dtype)
    top = jnp.maximum(top, 0.0).astype(compute_dtype)
    bot = jnp.maximum(bot, 0.0).astype(compute_dtype)

    # circular padded layout: [tile | bottom_halo | zeros | top_halo]
    # (PAD >= W guarantees the +/-W wraps land only on halo data / zeros)
    pieces = [acc, bot]
    nz = 2 * PAD - 2 * W
    if nz > 0:
        pieces.append(jnp.zeros((C, nz), compute_dtype))
    pieces.append(top)
    padded = jnp.concatenate(pieces, axis=1)           # (C, L)

    # Column index; piecewise so it is also correct inside the top-halo row
    # (tile and bottom-halo regions already start at multiples of W).
    lane = jax.lax.broadcasted_iota(jnp.int32, (1, L), 1)
    col = jnp.where(lane >= L - W, lane - (L - W), lane % W)
    zero = jnp.zeros((), compute_dtype)
    lft = jnp.where(col != 0, pltpu.roll(padded, 1, axis=1), zero)         # x-1 nbr
    rgt = jnp.where(col != W - 1, pltpu.roll(padded, L - 1, axis=1), zero)  # x+1 nbr

    # ---- depthwise 3x3, padding=1, with only 4 rolls total ----
    # per-dy horizontal combos of {left, center, right}, then combine rows
    # with rolls by +W (row above) and -W (row below).
    k9 = dwk_ref[...].astype(compute_dtype)            # (C, 9), tap order dy*3 + dx

    def hcombo(dy):
        return (k9[:, 3 * dy + 0:3 * dy + 1] * lft
                + k9[:, 3 * dy + 1:3 * dy + 2] * padded
                + k9[:, 3 * dy + 2:3 * dy + 3] * rgt)

    dw = (hcombo(1)
          + pltpu.roll(hcombo(0), W, axis=1)           # contribution of row y-1
          + pltpu.roll(hcombo(2), L - W, axis=1))      # contribution of row y+1
    dw = dw[:, :LT]                                    # lane-aligned slice

    # ---- pointwise 1x1 as (Cout, C) @ (C, LT): lane-dense MXU + stores ----
    # (depthwise bias is folded into pwb_ref by the wrapper)
    y = jnp.dot(pww_ref[...], dw.astype(pww_ref.dtype),
                preferred_element_type=jnp.float32)    # (Cout, LT) f32
    y = jnp.maximum(y + pwb_ref[...], 0.0)
    o_ref[0] = y.astype(o_ref.dtype)


def _vmem_capacity_bytes():
    try:
        cap = int(pltpu.get_tpu_info().vmem_capacity_bytes)
        if cap >= (16 << 20):
            return cap
    except Exception:
        pass
    return 64 << 20            # conservative default (v7x per-core VMEM)


def _footprint_bytes(tH, W, C, Cout, num_ins, in_b, out_b, cmp_b):
    LT = tH * W
    PAD = max(128, _round_up(W, 128))
    L = LT + 2 * PAD
    x_blocks = 2 * num_ins * C * LT * in_b            # double-buffered input tiles
    out_blocks = 2 * Cout * LT * out_b                # double-buffered output tiles
    halo = 2 * 2 * num_ins * C * W * in_b             # double-buffered halo rows
    interm = 6 * C * L * cmp_b + Cout * LT * 4        # padded/lft/rgt/combos/dw + f32 y
    return x_blocks + out_blocks + halo + interm


def _pick_tile_h(N, H, W, C, Cout, num_ins, in_b, out_b, cmp_b, budget):
    """Largest row-tile tH dividing H with tH*W a multiple of 128 that fits the
    VMEM budget.  Returns (tH, lane_pad_needed)."""
    cands = [t for t in range(1, H + 1) if H % t == 0 and (t * W) % 128 == 0]
    if not cands:
        return H, True        # no lane-aligned row tiling -> pad H*W in wrapper
    fits = [t for t in cands
            if _footprint_bytes(t, W, C, Cout, num_ins, in_b, out_b, cmp_b) <= budget]
    if not fits:
        return min(cands), False
    best = max(fits)
    # v7x megacore: prefer an even total parallel extent if it costs <= 2x tile size
    if (N * (H // best)) % 2 == 1:
        even = [t for t in fits if (N * (H // t)) % 2 == 0 and 2 * t >= best]
        if even:
            best = max(even)
    return best, False


@functools.partial(jax.jit, static_argnames=("out_dtype",))
def weighted_input_conv(inputs_nchw, weight, dw_weight, dw_bias,
                        pw_weight, pw_bias, eps=1e-4, out_dtype=None):
    """inputs_nchw: list of (N, C, H, W).  Params in PyTorch layouts:
    weight (num_ins,), dw_weight (C,1,3,3), dw_bias (C,),
    pw_weight (Cout,C,1,1), pw_bias (Cout,).  Returns (N, Cout, H, W)."""
    num_ins = len(inputs_nchw)
    N, C, H, W = inputs_nchw[0].shape
    Cout = pw_weight.shape[0]
    in_dtype = inputs_nchw[0].dtype
    out_dtype = in_dtype if out_dtype is None else out_dtype

    # generation-aware compute dtype: bf16 VALU/XLU exists from v6e on;
    # keep the full f32 path (elementwise + MXU operands) on v5e and older.
    kind = jax.devices()[0].device_kind.lower()
    use_bf16 = any(s in kind for s in ("v6", "v7", "7x", "trillium"))
    compute_dtype = jnp.bfloat16 if use_bf16 else jnp.float32
    mxu_dtype = jnp.bfloat16 if use_bf16 else jnp.float32

    # generation-aware tile budget + vmem limit
    cap = _vmem_capacity_bytes()
    budget = int(0.50 * cap)
    vmem_limit = int(0.75 * cap)

    in_b = jnp.dtype(in_dtype).itemsize
    out_b = jnp.dtype(out_dtype).itemsize
    cmp_b = jnp.dtype(compute_dtype).itemsize
    tH, pad_lanes = _pick_tile_h(N, H, W, C, Cout, num_ins,
                                 in_b, out_b, cmp_b, budget)
    n_ht = H // tH
    LT = _round_up(H * W, 128) if pad_lanes else tH * W
    out_len = n_ht * LT

    # fusion weights (ReLU + normalize) -> SMEM scalars
    wn = jnp.maximum(weight.astype(jnp.float32), 0.0)
    wn = wn / (wn.sum() + eps)

    # NCHW-native: only free contiguous reshapes of the big tensors; lane-pad
    # only in the (rare) unaligned fallback.
    x_flat = [a.reshape(N, C, H * W) for a in inputs_nchw]
    if pad_lanes:
        x_flat = [jnp.pad(a, ((0, 0), (0, 0), (0, LT - H * W))) for a in x_flat]

    # one-row halos per H-tile (tiny side inputs; zeros at the image borders).
    # When a single tile covers H they are identically zero -> no HBM traffic
    # beyond a constant, and no slicing/transpose work.
    if n_ht == 1:
        halo_top = jnp.zeros((num_ins, N, 1, C, W), in_dtype)
        halo_bot = halo_top
    else:
        zrow = jnp.zeros((N, C, 1, W), in_dtype)
        tops, bots = [], []
        for a in inputs_nchw:
            last_rows = a[:, :, tH - 1::tH, :]                           # (N,C,n_ht,W)
            first_rows = a[:, :, 0::tH, :]
            top = jnp.concatenate([zrow, last_rows[:, :, :n_ht - 1, :]], axis=2)
            bot = jnp.concatenate([first_rows[:, :, 1:, :], zrow], axis=2)
            tops.append(jnp.transpose(top, (0, 2, 1, 3)))                # (N,n_ht,C,W)
            bots.append(jnp.transpose(bot, (0, 2, 1, 3)))
        halo_top = jnp.stack(tops, axis=0)                               # (num_ins,N,n_ht,C,W)
        halo_bot = jnp.stack(bots, axis=0)

    # params in kernel-friendly layouts
    dwk = dw_weight.reshape(C, 9).astype(jnp.float32)    # tap order dy*3 + dx
    pww = pw_weight[:, :, 0, 0].astype(mxu_dtype)        # (Cout, C) MXU operand
    # fold the depthwise bias into the pointwise bias (exact, computed in f32):
    #   pww @ (dw + dwb) + pwb == pww @ dw + (pww_f32 @ dwb + pwb)
    pwb_eff = (jnp.einsum('oc,c->o', pw_weight[:, :, 0, 0].astype(jnp.float32),
                          dw_bias.astype(jnp.float32))
               + pw_bias.astype(jnp.float32)).reshape(Cout, 1)

    x_spec = pl.BlockSpec((1, C, LT), lambda n, i: (n, 0, i))
    halo_spec = pl.BlockSpec((num_ins, 1, 1, C, W), lambda n, i: (0, n, i, 0, 0))
    full2d = lambda s: pl.BlockSpec(s, lambda n, i: (0, 0))

    in_specs = ([pl.BlockSpec(memory_space=pltpu.MemorySpace.SMEM)]      # wn
                + [x_spec] * num_ins
                + [halo_spec, halo_spec,
                   full2d((C, 9)), full2d((Cout, C)), full2d((Cout, 1))])

    out_flat = pl.pallas_call(
        functools.partial(_wic_kernel, num_ins=num_ins, W=W,
                          compute_dtype=compute_dtype),
        out_shape=jax.ShapeDtypeStruct((N, Cout, out_len), out_dtype),
        grid=(N, n_ht),
        in_specs=in_specs,
        out_specs=pl.BlockSpec((1, Cout, LT), lambda n, i: (n, 0, i)),
        compiler_params=pltpu.CompilerParams(
            dimension_semantics=("parallel", "parallel"),
            vmem_limit_bytes=vmem_limit),
    )(wn, *x_flat, halo_top, halo_bot, dwk, pww, pwb_eff)

    if out_len != H * W:
        out_flat = out_flat[:, :, :H * W]
    return out_flat.reshape(N, Cout, H, W)               # free reshape back to NCHW


if __name__ == "__main__":
    N, C, H, W, Cout, num_ins = 2, 4, 16, 16, 8, 2
    eps = 1e-4

    key = jax.random.PRNGKey(0)
    ks = jax.random.split(key, 8)
    inputs = [jax.random.normal(ks[i], (N, C, H, W), jnp.float32)
              for i in range(num_ins)]
    weight = jnp.ones((num_ins,), jnp.float32)            # Parameter(...).fill_(1.0)
    dw_weight = 0.1 * jax.random.normal(ks[4], (C, 1, 3, 3), jnp.float32)
    dw_bias = 0.1 * jax.random.normal(ks[5], (C,), jnp.float32)
    pw_weight = 0.1 * jax.random.normal(ks[6], (Cout, C, 1, 1), jnp.float32)
    pw_bias = 0.1 * jax.random.normal(ks[7], (Cout,), jnp.float32)

    out = weighted_input_conv(inputs, weight, dw_weight, dw_bias,
                              pw_weight, pw_bias, eps)
    out = jax.block_until_ready(out)

    # pure-JAX f32 reference (NCHW, same math)
    wv = jnp.maximum(weight, 0.0)
    wv = wv / (wv.sum() + eps)
    x = sum(wv[i] * inputs[i] for i in range(num_ins))
    x = jnp.maximum(x, 0.0)
    xp = jnp.pad(x, ((0, 0), (0, 0), (1, 1), (1, 1)))
    dwref = jnp.zeros_like(x)
    for dy in range(3):
        for dx in range(3):
            dwref = dwref + (dw_weight[:, 0, dy, dx][None, :, None, None]
                             * xp[:, :, dy:dy + H, dx:dx + W])
    dwref = dwref + dw_bias[None, :, None, None]
    yref = (jnp.einsum('nchw,oc->nohw', dwref, pw_weight[:, :, 0, 0])
            + pw_bias[None, :, None, None])
    yref = jnp.maximum(yref, 0.0)

    assert out.shape == (N, Cout, H, W)
    err = float(jnp.max(jnp.abs(out - yref)))
    # bf16 elementwise + bf16 MXU path on v6e/v7x -> loosened vs f32 reference;
    # on v5e the whole kernel is f32 and the error is ~1e-6.
    assert jnp.allclose(out, yref, atol=4e-2, rtol=4e-2), err
    print("KERNEL_OK")
</pallas_src>

<mosaic_0001>
module attributes {stable_mosaic.version = 11 : i64} {
  func.func @_wic_kernel(%arg0: i32, %arg1: i32, %arg2: memref<2xf32, #tpu.memory_space<smem>>, %arg3: memref<1x4x256xf32, #tpu.memory_space<vmem>>, %arg4: memref<1x4x256xf32, #tpu.memory_space<vmem>>, %arg5: memref<2x1x1x4x16xf32, #tpu.memory_space<vmem>>, %arg6: memref<2x1x1x4x16xf32, #tpu.memory_space<vmem>>, %arg7: memref<4x9xf32, #tpu.memory_space<vmem>>, %arg8: memref<8x4xf32, #tpu.memory_space<vmem>>, %arg9: memref<8x1xf32, #tpu.memory_space<vmem>>, %arg10: memref<1x8x256xf32, #tpu.memory_space<vmem>>) attributes {dimension_semantics = [#tpu.dimension_semantics<parallel>, #tpu.dimension_semantics<parallel>], iteration_bounds = array<i64: 2, 1>, scalar_prefetch = 0 : i64, scratch_operands = 0 : i64, tpu.core_type = #tpu.core_type<tc>, window_params = [{transform_indices = @transform_0, window_bounds = array<i64: 2>}, {transform_indices = @transform_1, window_bounds = array<i64: 1, 4, 256>}, {transform_indices = @transform_2, window_bounds = array<i64: 1, 4, 256>}, {transform_indices = @transform_3, window_bounds = array<i64: 2, 1, 1, 4, 16>}, {transform_indices = @transform_4, window_bounds = array<i64: 2, 1, 1, 4, 16>}, {pipeline_mode = #tpu.pipeline_mode<synchronous>, transform_indices = @transform_5, window_bounds = array<i64: 4, 9>}, {pipeline_mode = #tpu.pipeline_mode<synchronous>, transform_indices = @transform_6, window_bounds = array<i64: 8, 4>}, {pipeline_mode = #tpu.pipeline_mode<synchronous>, transform_indices = @transform_7, window_bounds = array<i64: 8, 1>}, {transform_indices = @transform_8, window_bounds = array<i64: 1, 8, 256>}]} {
    %c0 = arith.constant 0 : index
    %0 = memref.load %arg2[%c0] : memref<2xf32, #tpu.memory_space<smem>>
    %c0_0 = arith.constant 0 : index
    %c0_1 = arith.constant 0 : index
    %c0_2 = arith.constant 0 : index
    %1 = vector.load %arg3[%c0_0, %c0_1, %c0_2] : memref<1x4x256xf32, #tpu.memory_space<vmem>>, vector<1x4x256xf32>
    %2 = vector.shape_cast %1 : vector<1x4x256xf32> to vector<4x256xf32>
    %3 = vector.broadcast %0 : f32 to vector<4x256xf32>
    %4 = arith.mulf %3, %2 : vector<4x256xf32>
    %c0_3 = arith.constant 0 : index
    %5 = memref.load %arg2[%c0_3] : memref<2xf32, #tpu.memory_space<smem>>
    %c0_4 = arith.constant 0 : index
    %c0_5 = arith.constant 0 : index
    %c0_6 = arith.constant 0 : index
    %c0_7 = arith.constant 0 : index
    %c0_8 = arith.constant 0 : index
    %6 = vector.load %arg5[%c0_4, %c0_5, %c0_6, %c0_7, %c0_8] : memref<2x1x1x4x16xf32, #tpu.memory_space<vmem>>, vector<1x1x1x4x16xf32>
    %7 = vector.shape_cast %6 : vector<1x1x1x4x16xf32> to vector<4x16xf32>
    %8 = vector.broadcast %5 : f32 to vector<4x16xf32>
    %9 = arith.mulf %8, %7 : vector<4x16xf32>
    %c0_9 = arith.constant 0 : index
    %10 = memref.load %arg2[%c0_9] : memref<2xf32, #tpu.memory_space<smem>>
    %c0_10 = arith.constant 0 : index
    %c0_11 = arith.constant 0 : index
    %c0_12 = arith.constant 0 : index
    %c0_13 = arith.constant 0 : index
    %c0_14 = arith.constant 0 : index
    %11 = vector.load %arg6[%c0_10, %c0_11, %c0_12, %c0_13, %c0_14] : memref<2x1x1x4x16xf32, #tpu.memory_space<vmem>>, vector<1x1x1x4x16xf32>
    %12 = vector.shape_cast %11 : vector<1x1x1x4x16xf32> to vector<4x16xf32>
    %13 = vector.broadcast %10 : f32 to vector<4x16xf32>
    %14 = arith.mulf %13, %12 : vector<4x16xf32>
    %c1 = arith.constant 1 : index
    %15 = memref.load %arg2[%c1] : memref<2xf32, #tpu.memory_space<smem>>
    %c0_15 = arith.constant 0 : index
    %c0_16 = arith.constant 0 : index
    %c0_17 = arith.constant 0 : index
    %16 = vector.load %arg4[%c0_15, %c0_16, %c0_17] : memref<1x4x256xf32, #tpu.memory_space<vmem>>, vector<1x4x256xf32>
    %17 = vector.shape_cast %16 : vector<1x4x256xf32> to vector<4x256xf32>
    %18 = vector.broadcast %15 : f32 to vector<4x256xf32>
    %19 = arith.mulf %18, %17 : vector<4x256xf32>
    %20 = arith.addf %4, %19 : vector<4x256xf32>
    %c1_18 = arith.constant 1 : index
    %21 = memref.load %arg2[%c1_18] : memref<2xf32, #tpu.memory_space<smem>>
    %c1_19 = arith.constant 1 : index
    %c0_20 = arith.constant 0 : index
    %c0_21 = arith.constant 0 : index
    %c0_22 = arith.constant 0 : index
    %c0_23 = arith.constant 0 : index
    %22 = vector.load %arg5[%c1_19, %c0_20, %c0_21, %c0_22, %c0_23] : memref<2x1x1x4x16xf32, #tpu.memory_space<vmem>>, vector<1x1x1x4x16xf32>
    %23 = vector.shape_cast %22 : vector<1x1x1x4x16xf32> to vector<4x16xf32>
    %24 = vector.broadcast %21 : f32 to vector<4x16xf32>
    %25 = arith.mulf %24, %23 : vector<4x16xf32>
    %26 = arith.addf %9, %25 : vector<4x16xf32>
    %c1_24 = arith.constant 1 : index
    %27 = memref.load %arg2[%c1_24] : memref<2xf32, #tpu.memory_space<smem>>
    %c1_25 = arith.constant 1 : index
    %c0_26 = arith.constant 0 : index
    %c0_27 = arith.constant 0 : index
    %c0_28 = arith.constant 0 : index
    %c0_29 = arith.constant 0 : index
    %28 = vector.load %arg6[%c1_25, %c0_26, %c0_27, %c0_28, %c0_29] : memref<2x1x1x4x16xf32, #tpu.memory_space<vmem>>, vector<1x1x1x4x16xf32>
    %29 = vector.shape_cast %28 : vector<1x1x1x4x16xf32> to vector<4x16xf32>
    %30 = vector.broadcast %27 : f32 to vector<4x16xf32>
    %31 = arith.mulf %30, %29 : vector<4x16xf32>
    %32 = arith.addf %14, %31 : vector<4x16xf32>
    %cst = arith.constant 0.000000e+00 : f32
    %33 = vector.broadcast %cst : f32 to vector<4x256xf32>
    %34 = arith.maximumf %20, %33 : vector<4x256xf32>
    %cst_30 = arith.constant 0.000000e+00 : f32
    %35 = vector.broadcast %cst_30 : f32 to vector<4x16xf32>
    %36 = arith.maximumf %26, %35 : vector<4x16xf32>
    %cst_31 = arith.constant 0.000000e+00 : f32
    %37 = vector.broadcast %cst_31 : f32 to vector<4x16xf32>
    %38 = arith.maximumf %32, %37 : vector<4x16xf32>
    %cst_32 = arith.constant 0.000000e+00 : f32
    %39 = vector.broadcast %cst_32 : f32 to vector<4x224xf32>
    %40 = tpu.concatenate %34, %38, %39, %36 in 1 : vector<4x256xf32>, vector<4x16xf32>, vector<4x224xf32>, vector<4x16xf32> -> vector<4x512xf32>
    %41 = tpu.iota {dimensions = array<i32: 1>} : vector<1x512xi32>
    %c496_i32 = arith.constant 496 : i32
    %42 = vector.broadcast %c496_i32 : i32 to vector<1x512xi32>
    %43 = arith.cmpi sge, %41, %42 : vector<1x512xi32>
    %c496_i32_33 = arith.constant 496 : i32
    %44 = vector.broadcast %c496_i32_33 : i32 to vector<1x512xi32>
    %45 = arith.subi %41, %44 : vector<1x512xi32>
    %c16_i32 = arith.constant 16 : i32
    %c0_i32 = arith.constant 0 : i32
    %46 = arith.cmpi eq, %c16_i32, %c0_i32 : i32
    %c1_i32 = arith.constant 1 : i32
    %47 = arith.select %46, %c1_i32, %c16_i32 : i32
    %48 = vector.broadcast %47 : i32 to vector<1x512xi32>
    %49 = arith.remsi %41, %48 : vector<1x512xi32>
    %c0_i32_34 = arith.constant 0 : i32
    %50 = vector.broadcast %c0_i32_34 : i32 to vector<1x512xi32>
    %51 = arith.cmpi ne, %49, %50 : vector<1x512xi32>
    %c0_i32_35 = arith.constant 0 : i32
    %52 = vector.broadcast %c0_i32_35 : i32 to vector<1x512xi32>
    %53 = arith.cmpi slt, %49, %52 : vector<1x512xi32>
    %c0_i32_36 = arith.constant 0 : i32
    %54 = arith.cmpi slt, %47, %c0_i32_36 : i32
    %55 = vector.broadcast %54 : i1 to vector<1x512xi1>
    %56 = vector.broadcast %55 : vector<1x512xi1> to vector<1x512xi1>
    %57 = arith.xori %53, %56 : vector<1x512xi1>
    %58 = arith.andi %57, %51 : vector<1x512xi1>
    %59 = vector.broadcast %47 : i32 to vector<1x512xi32>
    %60 = arith.addi %49, %59 : vector<1x512xi32>
    %61 = arith.select %58, %60, %49 : vector<1x512xi1>, vector<1x512xi32>
    %62 = arith.select %43, %45, %61 : vector<1x512xi1>, vector<1x512xi32>
    %c0_i32_37 = arith.constant 0 : i32
    %63 = vector.broadcast %c0_i32_37 : i32 to vector<1x512xi32>
    %64 = arith.cmpi ne, %62, %63 : vector<1x512xi32>
    %c1_i32_38 = arith.constant 1 : i32
    %65 = tpu.dynamic_rotate %40 by %c1_i32_38 dim 1 : vector<4x512xf32>, i32 -> vector<4x512xf32>
    %cst_39 = arith.constant 0.000000e+00 : f32
    %66 = vector.shape_cast %64 : vector<1x512xi1> to vector<1x512xi1>
    %67 = vector.broadcast %66 : vector<1x512xi1> to vector<4x512xi1>
    %68 = vector.broadcast %cst_39 : f32 to vector<4x512xf32>
    %69 = arith.select %67, %65, %68 : vector<4x512xi1>, vector<4x512xf32>
    %c15_i32 = arith.constant 15 : i32
    %70 = vector.broadcast %c15_i32 : i32 to vector<1x512xi32>
    %71 = arith.cmpi ne, %62, %70 : vector<1x512xi32>
    %c511_i32 = arith.constant 511 : i32
    %72 = tpu.dynamic_rotate %40 by %c511_i32 dim 1 : vector<4x512xf32>, i32 -> vector<4x512xf32>
    %cst_40 = arith.constant 0.000000e+00 : f32
    %73 = vector.shape_cast %71 : vector<1x512xi1> to vector<1x512xi1>
    %74 = vector.broadcast %73 : vector<1x512xi1> to vector<4x512xi1>
    %75 = vector.broadcast %cst_40 : f32 to vector<4x512xf32>
    %76 = arith.select %74, %72, %75 : vector<4x512xi1>, vector<4x512xf32>
    %c0_41 = arith.constant 0 : index
    %c0_42 = arith.constant 0 : index
    %77 = vector.load %arg7[%c0_41, %c0_42] : memref<4x9xf32, #tpu.memory_space<vmem>>, vector<4x9xf32>
    %78 = vector.extract_strided_slice %77 {offsets = [0, 3], sizes = [4, 1], strides = [1, 1]} : vector<4x9xf32> to vector<4x1xf32>
    %79 = vector.broadcast %78 : vector<4x1xf32> to vector<4x512xf32>
    %80 = arith.mulf %79, %69 : vector<4x512xf32>
    %81 = vector.extract_strided_slice %77 {offsets = [0, 4], sizes = [4, 1], strides = [1, 1]} : vector<4x9xf32> to vector<4x1xf32>
    %82 = vector.broadcast %81 : vector<4x1xf32> to vector<4x512xf32>
    %83 = arith.mulf %82, %40 : vector<4x512xf32>
    %84 = arith.addf %80, %83 : vector<4x512xf32>
    %85 = vector.extract_strided_slice %77 {offsets = [0, 5], sizes = [4, 1], strides = [1, 1]} : vector<4x9xf32> to vector<4x1xf32>
    %86 = vector.broadcast %85 : vector<4x1xf32> to vector<4x512xf32>
    %87 = arith.mulf %86, %76 : vector<4x512xf32>
    %88 = arith.addf %84, %87 : vector<4x512xf32>
    %89 = vector.extract_strided_slice %77 {offsets = [0, 0], sizes = [4, 1], strides = [1, 1]} : vector<4x9xf32> to vector<4x1xf32>
    %90 = vector.broadcast %89 : vector<4x1xf32> to vector<4x512xf32>
    %91 = arith.mulf %90, %69 : vector<4x512xf32>
    %92 = vector.extract_strided_slice %77 {offsets = [0, 1], sizes = [4, 1], strides = [1, 1]} : vector<4x9xf32> to vector<4x1xf32>
    %93 = vector.broadcast %92 : vector<4x1xf32> to vector<4x512xf32>
    %94 = arith.mulf %93, %40 : vector<4x512xf32>
    %95 = arith.addf %91, %94 : vector<4x512xf32>
    %96 = vector.extract_strided_slice %77 {offsets = [0, 2], sizes = [4, 1], strides = [1, 1]} : vector<4x9xf32> to vector<4x1xf32>
    %97 = vector.broadcast %96 : vector<4x1xf32> to vector<4x512xf32>
    %98 = arith.mulf %97, %76 : vector<4x512xf32>
    %99 = arith.addf %95, %98 : vector<4x512xf32>
    %c16_i32_43 = arith.constant 16 : i32
    %100 = tpu.dynamic_rotate %99 by %c16_i32_43 dim 1 : vector<4x512xf32>, i32 -> vector<4x512xf32>
    %101 = arith.addf %88, %100 : vector<4x512xf32>
    %102 = vector.extract_strided_slice %77 {offsets = [0, 6], sizes = [4, 1], strides = [1, 1]} : vector<4x9xf32> to vector<4x1xf32>
    %103 = vector.broadcast %102 : vector<4x1xf32> to vector<4x512xf32>
    %104 = arith.mulf %103, %69 : vector<4x512xf32>
    %105 = vector.extract_strided_slice %77 {offsets = [0, 7], sizes = [4, 1], strides = [1, 1]} : vector<4x9xf32> to vector<4x1xf32>
    %106 = vector.broadcast %105 : vector<4x1xf32> to vector<4x512xf32>
    %107 = arith.mulf %106, %40 : vector<4x512xf32>
    %108 = arith.addf %104, %107 : vector<4x512xf32>
    %109 = vector.extract_strided_slice %77 {offsets = [0, 8], sizes = [4, 1], strides = [1, 1]} : vector<4x9xf32> to vector<4x1xf32>
    %110 = vector.broadcast %109 : vector<4x1xf32> to vector<4x512xf32>
    %111 = arith.mulf %110, %76 : vector<4x512xf32>
    %112 = arith.addf %108, %111 : vector<4x512xf32>
    %c496_i32_44 = arith.constant 496 : i32
    %113 = tpu.dynamic_rotate %112 by %c496_i32_44 dim 1 : vector<4x512xf32>, i32 -> vector<4x512xf32>
    %114 = arith.addf %101, %113 : vector<4x512xf32>
    %115 = vector.extract_strided_slice %114 {offsets = [0, 0], sizes = [4, 256], strides = [1, 1]} : vector<4x512xf32> to vector<4x256xf32>
    %c0_45 = arith.constant 0 : index
    %c0_46 = arith.constant 0 : index
    %116 = vector.load %arg8[%c0_45, %c0_46] : memref<8x4xf32, #tpu.memory_space<vmem>>, vector<8x4xf32>
    %cst_47 = arith.constant dense<0.000000e+00> : vector<8x256xf32>
    %117 = tpu.matmul %116, %115, %cst_47 {dimension_numbers = #tpu.dot_dimension_numbers<[1], [0], [0], [1], [0, 0, 1, 1], [], []>} : vector<8x4xf32>, vector<4x256xf32>, vector<8x256xf32> -> vector<8x256xf32>
    %c0_48 = arith.constant 0 : index
    %c0_49 = arith.constant 0 : index
    %118 = vector.load %arg9[%c0_48, %c0_49] : memref<8x1xf32, #tpu.memory_space<vmem>>, vector<8x1xf32>
    %119 = vector.broadcast %118 : vector<8x1xf32> to vector<8x256xf32>
    %120 = arith.addf %117, %119 : vector<8x256xf32>
    %cst_50 = arith.constant 0.000000e+00 : f32
    %121 = vector.broadcast %cst_50 : f32 to vector<8x256xf32>
    %122 = arith.maximumf %120, %121 : vector<8x256xf32>
    %c0_51 = arith.constant 0 : index
    %c0_52 = arith.constant 0 : index
    %c0_53 = arith.constant 0 : index
    %123 = vector.load %arg10[%c0_51, %c0_52, %c0_53] : memref<1x8x256xf32, #tpu.memory_space<vmem>>, vector<1x8x256xf32>
    %124 = vector.shape_cast %123 : vector<1x8x256xf32> to vector<8x256xf32>
    %125 = vector.shape_cast %122 : vector<8x256xf32> to vector<1x8x256xf32>
    tpu.vector_store %arg10[%c0_51, %c0_52, %c0_53], %125 {strides = array<i32>} : memref<1x8x256xf32, #tpu.memory_space<vmem>>, vector<1x8x256xf32>,
    return
  }
  func.func @transform_0(%arg0: i32, %arg1: i32) -> i32 {
    %c0_i32 = arith.constant 0 : i32
    %c0_i32_0 = arith.constant 0 : i32
    return %c0_i32 : i32
  }
  func.func @transform_1(%arg0: i32, %arg1: i32) -> (i32, i32, i32) {
    %c0_i32 = arith.constant 0 : i32
    %c0_i32_0 = arith.constant 0 : i32
    return %arg0, %c0_i32, %arg1 : i32, i32, i32
  }
  func.func @transform_2(%arg0: i32, %arg1: i32) -> (i32, i32, i32) {
    %c0_i32 = arith.constant 0 : i32
    %c0_i32_0 = arith.constant 0 : i32
    return %arg0, %c0_i32, %arg1 : i32, i32, i32
  }
  func.func @transform_3(%arg0: i32, %arg1: i32) -> (i32, i32, i32, i32, i32) {
    %c0_i32 = arith.constant 0 : i32
    %c0_i32_0 = arith.constant 0 : i32
    %c0_i32_1 = arith.constant 0 : i32
    %c0_i32_2 = arith.constant 0 : i32
    return %c0_i32, %arg0, %arg1, %c0_i32_0, %c0_i32_1 : i32, i32, i32, i32, i32
  }
  func.func @transform_4(%arg0: i32, %arg1: i32) -> (i32, i32, i32, i32, i32) {
    %c0_i32 = arith.constant 0 : i32
    %c0_i32_0 = arith.constant 0 : i32
    %c0_i32_1 = arith.constant 0 : i32
    %c0_i32_2 = arith.constant 0 : i32
    return %c0_i32, %arg0, %arg1, %c0_i32_0, %c0_i32_1 : i32, i32, i32, i32, i32
  }
  func.func @transform_5(%arg0: i32, %arg1: i32) -> (i32, i32) {
    %c0_i32 = arith.constant 0 : i32
    %c0_i32_0 = arith.constant 0 : i32
    %c0_i32_1 = arith.constant 0 : i32
    return %c0_i32, %c0_i32_0 : i32, i32
  }
  func.func @transform_6(%arg0: i32, %arg1: i32) -> (i32, i32) {
    %c0_i32 = arith.constant 0 : i32
    %c0_i32_0 = arith.constant 0 : i32
    %c0_i32_1 = arith.constant 0 : i32
    return %c0_i32, %c0_i32_0 : i32, i32
  }
  func.func @transform_7(%arg0: i32, %arg1: i32) -> (i32, i32) {
    %c0_i32 = arith.constant 0 : i32
    %c0_i32_0 = arith.constant 0 : i32
    %c0_i32_1 = arith.constant 0 : i32
    return %c0_i32, %c0_i32_0 : i32, i32
  }
  func.func @transform_8(%arg0: i32, %arg1: i32) -> (i32, i32, i32) {
    %c0_i32 = arith.constant 0 : i32
    %c0_i32_0 = arith.constant 0 : i32
    return %arg0, %c0_i32, %arg1 : i32, i32, i32
  }
}

</mosaic_0001>

<llo_original>
// kernel: weighted_input_conv.1
$region0: #{weighted_input_conv.1}
  #allocation0 [shape = 'u32[]', space=smem, size = 0x4, offset = 0x4, fixed_abs, tag = 'smem constant byte address 0x4 - core index']
  #allocation1 [shape = 'u32[144,128]{1,0:T(1,128)}', space=vmem, size = 0x12000, scoped, tag = 'internal scratch']
  %s0 = inlined_call_operand.vmem [shape: f32[2], index: 0, kind: input, shape index: {}]
  %s1 = inlined_call_operand.vmem [shape: f32[2,4,256], index: 1, kind: input, shape index: {}]
  %s2 = inlined_call_operand.vmem [shape: f32[2,4,256], index: 2, kind: input, shape index: {}]
  %s3 = inlined_call_operand.vmem [shape: f32[2,2,1,4,16], index: 3, kind: input, shape index: {}, may-alias: {3,4}]
  %s4 = inlined_call_operand.vmem [shape: f32[2,2,1,4,16], index: 4, kind: input, shape index: {}, may-alias: {3,4}]
  %s5 = inlined_call_operand.vmem [shape: f32[4,9], index: 5, kind: input, shape index: {}]
  %s6 = inlined_call_operand.vmem [shape: f32[8,4], index: 6, kind: input, shape index: {}]
  %s7 = inlined_call_operand.vmem [shape: f32[8,1], index: 7, kind: input, shape index: {}]
  %s8 = inlined_call_operand.vmem [shape: f32[2,8,256], index: 8, kind: output, shape index: {}]
  %s9 = sld [smem:[#allocation0]]
  $region151: #{weighted_input_conv.1} parent=0
    _
  %s11 = ssub.s32 1, %s9
  %s12 = scalar_select 0, %s11, %s9
  $region1: #{weighted_input_conv.1} parent=0
    #allocation2 [shape = 'u8[512]{0}', space=smem, size = 0x200, scoped, tag = 'input window, operand 0, single buffered']
    #allocation3 [shape = 's32[2]{0}', space=sflag, size = 0x8, scoped, tag = 'scoped memory for weighted_input_conv.1']
    #allocation4 [shape = 'u8[8192]{0}', space=vmem, size = 0x2000, scoped, tag = 'input window, operand 3']
    #allocation5 [shape = 'u8[8192]{0}', space=vmem, size = 0x2000, scoped, tag = 'input window, operand 4']
    %13 = vsyncpa [#allocation3], 0
    loop: start=0, step=1, limit=4
    $region2: #{weighted_input_conv.1} parent=1 // loop_pre_header
      _
    $region3: #{weighted_input_conv.1} parent=1 // loop_header
      %s15 = sphi 0, %s19
      %p16 = scmp.ge.s32.totalorder %s15, 4
      %s22 = sphi 0, %s34
      %s23 = sphi 0, %s30
      %s24 = sphi 0, %s22
      %s25 = sphi 0, %s23
      %s26 = sphi 0, %s24
      %s27 = sphi 0, %s25
      %s35 = sphi 0, %s35
      %s37 = sphi 0, %s35
      %s38 = sphi 0, %s37
      %s52 = sphi 0, %s38
      %s60 = sphi 0, %s62
      %s63 = sphi 0, %s60
      %s64 = sphi 0, %s63
      %s80 = sphi 0, %s64
      %s88 = sphi 0, %s90
      %s91 = sphi 0, %s88
      %s92 = sphi 0, %s91
      %s108 = sphi 0, %s92
      %s116 = sphi 0, %s118
      %s119 = sphi 0, %s116
      %s120 = sphi 0, %s119
      %s136 = sphi 0, %s120
      %s144 = sphi 0, %s146
      %s147 = sphi 0, %s144
      %s148 = sphi 0, %s147
      %s164 = sphi 0, %s148
      %s168 = sphi 0, %s168
      %s170 = sphi 0, %s168
      %s171 = sphi 0, %s170
      %s185 = sphi 0, %s171
      %s189 = sphi 0, %s189
      %s191 = sphi 0, %s189
      %s192 = sphi 0, %s191
      %s206 = sphi 0, %s192
      %s210 = sphi 0, %s210
      %s212 = sphi 0, %s210
      %s213 = sphi 0, %s212
      %s227 = sphi 0, %s213
      %s235 = sphi 0, %s237
      %s238 = sphi 0, %s235
      %s239 = sphi 0, %s238
      %s255 = sphi 0, %s239
    $region4: #{weighted_input_conv.1} parent=1 // loop_header_branch
      %18 = sbr.rel (%p16) target = $region8
    $region5: #{weighted_input_conv.1} parent=1 // loop_body
      %s20 = ssub.s32 %s15, 1
      %s21 = ssub.s32 %s15, 2
      %s28 = sadd.s32 1, %s23
      %p29 = scmp.ge.s32.totalorder %s28, 1
      %s30 = scalar_select %p29, 0, %s28
      %s31 = sadd.s32 1, %s22
      %s32 = scalar_select %p29, %s31, %s22
      %p33 = scmp.ge.s32.totalorder %s32, 2
      %s34 = scalar_select %p33, 0, %s32
      %s36 = sadd.s32 %s35, 1
      %p39 = scmp.eq.s32.totalorder %s15, 1
      %p40 = scmp.ne.s32.totalorder %s35, %s37
      %p41 = scmp.eq.s32.totalorder %s15, 0
      %p42 = por %p40, %p41
      %p43 = scmp.ne.s32.totalorder %s35, %s37
      %p44 = scmp.eq.s32.totalorder %s20, 1
      %p45 = por %p43, %p44
      %p46 = scmp.ne.s32.totalorder %s37, %s38
      %p47 = scmp.eq.s32.totalorder %s20, 0
      %p48 = por %p46, %p47
      %p49 = scmp.ne.s32.totalorder %s37, %s38
      %p50 = scmp.eq.s32.totalorder %s21, 1
      %p51 = por %p49, %p50
      %p53 = scmp.ne.s32.totalorder %s38, %s52
      %p54 = scmp.eq.s32.totalorder %s21, 0
      %p55 = por %p53, %p54
      %s56 = ssub.s32 %s22, %s34
      %s57 = ssub.s32 %s23, %s30
      %s58 = sor.u32 %s56, %s57
      %p59 = scmp.eq.s32.totalorder %s58, 0
      %s61 = sadd.s32 %s60, 1
      %s62 = scalar_select %p59, %s60, %s61
      %p65 = pneg %p59
      %p66 = scmp.eq.s32.totalorder %s15, 1
      %p67 = por %p65, %p66
      %p68 = scmp.ne.s32.totalorder %s60, %s63
      %p69 = scmp.eq.s32.totalorder %s15, 0
      %p70 = por %p68, %p69
      %p71 = scmp.ne.s32.totalorder %s60, %s63
      %p72 = scmp.eq.s32.totalorder %s20, 1
      %p73 = por %p71, %p72
      %p74 = scmp.ne.s32.totalorder %s63, %s64
      %p75 = scmp.eq.s32.totalorder %s20, 0
      %p76 = por %p74, %p75
      %p77 = scmp.ne.s32.totalorder %s63, %s64
      %p78 = scmp.eq.s32.totalorder %s21, 1
      %p79 = por %p77, %p78
      %p81 = scmp.ne.s32.totalorder %s64, %s80
      %p82 = scmp.eq.s32.totalorder %s21, 0
      %p83 = por %p81, %p82
      %s84 = ssub.s32 %s22, %s34
      %s85 = ssub.s32 %s23, %s30
      %s86 = sor.u32 %s84, %s85
      %p87 = scmp.eq.s32.totalorder %s86, 0
      %s89 = sadd.s32 %s88, 1
      %s90 = scalar_select %p87, %s88, %s89
      %p93 = pneg %p87
      %p94 = scmp.eq.s32.totalorder %s15, 1
      %p95 = por %p93, %p94
      %p96 = scmp.ne.s32.totalorder %s88, %s91
      %p97 = scmp.eq.s32.totalorder %s15, 0
      %p98 = por %p96, %p97
      %p99 = scmp.ne.s32.totalorder %s88, %s91
      %p100 = scmp.eq.s32.totalorder %s20, 1
      %p101 = por %p99, %p100
      %p102 = scmp.ne.s32.totalorder %s91, %s92
      %p103 = scmp.eq.s32.totalorder %s20, 0
      %p104 = por %p102, %p103
      %p105 = scmp.ne.s32.totalorder %s91, %s92
      %p106 = scmp.eq.s32.totalorder %s21, 1
      %p107 = por %p105, %p106
      %p109 = scmp.ne.s32.totalorder %s92, %s108
      %p110 = scmp.eq.s32.totalorder %s21, 0
      %p111 = por %p109, %p110
      %s112 = ssub.s32 %s22, %s34
      %s113 = ssub.s32 %s23, %s30
      %s114 = sor.u32 %s112, %s113
      %p115 = scmp.eq.s32.totalorder %s114, 0
      %s117 = sadd.s32 %s116, 1
      %s118 = scalar_select %p115, %s116, %s117
      %p121 = pneg %p115
      %p122 = scmp.eq.s32.totalorder %s15, 1
      %p123 = por %p121, %p122
      %p124 = scmp.ne.s32.totalorder %s116, %s119
      %p125 = scmp.eq.s32.totalorder %s15, 0
      %p126 = por %p124, %p125
      %p127 = scmp.ne.s32.totalorder %s116, %s119
      %p128 = scmp.eq.s32.totalorder %s20, 1
      %p129 = por %p127, %p128
      %p130 = scmp.ne.s32.totalorder %s119, %s120
      %p131 = scmp.eq.s32.totalorder %s20, 0
      %p132 = por %p130, %p131
      %p133 = scmp.ne.s32.totalorder %s119, %s120
      %p134 = scmp.eq.s32.totalorder %s21, 1
      %p135 = por %p133, %p134
      %p137 = scmp.ne.s32.totalorder %s120, %s136
      %p138 = scmp.eq.s32.totalorder %s21, 0
      %p139 = por %p137, %p138
      %s140 = ssub.s32 %s22, %s34
      %s141 = ssub.s32 %s23, %s30
      %s142 = sor.u32 %s140, %s141
      %p143 = scmp.eq.s32.totalorder %s142, 0
      %s145 = sadd.s32 %s144, 1
      %s146 = scalar_select %p143, %s144, %s145
      %p149 = pneg %p143
      %p150 = scmp.eq.s32.totalorder %s15, 1
      %p151 = por %p149, %p150
      %p152 = scmp.ne.s32.totalorder %s144, %s147
      %p153 = scmp.eq.s32.totalorder %s15, 0
      %p154 = por %p152, %p153
      %p155 = scmp.ne.s32.totalorder %s144, %s147
      %p156 = scmp.eq.s32.totalorder %s20, 1
      %p157 = por %p155, %p156
      %p158 = scmp.ne.s32.totalorder %s147, %s148
      %p159 = scmp.eq.s32.totalorder %s20, 0
      %p160 = por %p158, %p159
      %p161 = scmp.ne.s32.totalorder %s147, %s148
      %p162 = scmp.eq.s32.totalorder %s21, 1
      %p163 = por %p161, %p162
      %p165 = scmp.ne.s32.totalorder %s148, %s164
      %p166 = scmp.eq.s32.totalorder %s21, 0
      %p167 = por %p165, %p166
      %s169 = sadd.s32 %s168, 1
      %p172 = scmp.eq.s32.totalorder %s15, 1
      %p173 = scmp.ne.s32.totalorder %s168, %s170
      %p174 = scmp.eq.s32.totalorder %s15, 0
      %p175 = por %p173, %p174
      %p176 = scmp.ne.s32.totalorder %s168, %s170
      %p177 = scmp.eq.s32.totalorder %s20, 1
      %p178 = por %p176, %p177
      %p179 = scmp.ne.s32.totalorder %s170, %s171
      %p180 = scmp.eq.s32.totalorder %s20, 0
      %p181 = por %p179, %p180
      %p182 = scmp.ne.s32.totalorder %s170, %s171
      %p183 = scmp.eq.s32.totalorder %s21, 1
      %p184 = por %p182, %p183
      %p186 = scmp.ne.s32.totalorder %s171, %s185
      %p187 = scmp.eq.s32.totalorder %s21, 0
      %p188 = por %p186, %p187
      %s190 = sadd.s32 %s189, 1
      %p193 = scmp.eq.s32.totalorder %s15, 1
      %p194 = scmp.ne.s32.totalorder %s189, %s191
      %p195 = scmp.eq.s32.totalorder %s15, 0
      %p196 = por %p194, %p195
      %p197 = scmp.ne.s32.totalorder %s189, %s191
      %p198 = scmp.eq.s32.totalorder %s20, 1
      %p199 = por %p197, %p198
      %p200 = scmp.ne.s32.totalorder %s191, %s192
      %p201 = scmp.eq.s32.totalorder %s20, 0
      %p202 = por %p200, %p201
      %p203 = scmp.ne.s32.totalorder %s191, %s192
      %p204 = scmp.eq.s32.totalorder %s21, 1
      %p205 = por %p203, %p204
      %p207 = scmp.ne.s32.totalorder %s192, %s206
      %p208 = scmp.eq.s32.totalorder %s21, 0
      %p209 = por %p207, %p208
      %s211 = sadd.s32 %s210, 1
      %p214 = scmp.eq.s32.totalorder %s15, 1
      %p215 = scmp.ne.s32.totalorder %s210, %s212
      %p216 = scmp.eq.s32.totalorder %s15, 0
      %p217 = por %p215, %p216
      %p218 = scmp.ne.s32.totalorder %s210, %s212
      %p219 = scmp.eq.s32.totalorder %s20, 1
      %p220 = por %p218, %p219
      %p221 = scmp.ne.s32.totalorder %s212, %s213
      %p222 = scmp.eq.s32.totalorder %s20, 0
      %p223 = por %p221, %p222
      %p224 = scmp.ne.s32.totalorder %s212, %s213
      %p225 = scmp.eq.s32.totalorder %s21, 1
      %p226 = por %p224, %p225
      %p228 = scmp.ne.s32.totalorder %s213, %s227
      %p229 = scmp.eq.s32.totalorder %s21, 0
      %p230 = por %p228, %p229
      %s231 = ssub.s32 %s22, %s34
      %s232 = ssub.s32 %s23, %s30
      %s233 = sor.u32 %s231, %s232
      %p234 = scmp.eq.s32.totalorder %s233, 0
      %s236 = sadd.s32 %s235, 1
      %s237 = scalar_select %p234, %s235, %s236
      %p240 = pneg %p234
      %p241 = scmp.eq.s32.totalorder %s15, 1
      %p242 = por %p240, %p241
      %p243 = scmp.ne.s32.totalorder %s235, %s238
      %p244 = scmp.eq.s32.totalorder %s15, 0
      %p245 = por %p243, %p244
      %p246 = scmp.ne.s32.totalorder %s235, %s238
      %p247 = scmp.eq.s32.totalorder %s20, 1
      %p248 = por %p246, %p247
      %p249 = scmp.ne.s32.totalorder %s238, %s239
      %p250 = scmp.eq.s32.totalorder %s20, 0
      %p251 = por %p249, %p250
      %p252 = scmp.ne.s32.totalorder %s238, %s239
      %p253 = scmp.eq.s32.totalorder %s21, 1
      %p254 = por %p252, %p253
      %p256 = scmp.ne.s32.totalorder %s239, %s255
      %p257 = scmp.eq.s32.totalorder %s21, 0
      %p258 = por %p256, %p257
      %p259 = scmp.le.s32.totalorder 1, %s15
      %p260 = scmp.lt.s32.totalorder %s15, 3
      %p261 = pnand %p259, %p260
      %p262 = pneg %p261
      // Predicated region
      $region9: #{weighted_input_conv.1} parent=5 // pred_check
        _
      $region10: #{weighted_input_conv.1} parent=5 // pred_check_branch
        %264 = sbr.rel (%p261) target = $region12
      $region11: #{weighted_input_conv.1} parent=5 // pred_region
        %s265 = ssub.s32 %s15, 1
        // Predicated region
        $region13: #{weighted_input_conv.1} parent=11 // pred_check
          %p266 = pneg %p48
        $region14: #{weighted_input_conv.1} parent=11 // pred_check_branch
          %268 = sbr.rel (%p266) target = $region16
        $region15: #{weighted_input_conv.1} parent=11 // pred_region
          %s270 = ssub.s32 16, 16
          %271 = vsyncadd [#allocation3], %s270
          %s273 = sshll.u32 %s0, 4
          %s274 = int_to_ptr.vmem [resolvable:$true] %s273
          %276 = dma.vmem_to_smem %s274, 16, [#allocation2], [#allocation3]
        $region16: #{weighted_input_conv.1} parent=11 // pred_fallthru
          _
        // Predicated region
        $region17: #{weighted_input_conv.1} parent=11 // pred_check
          %p277 = pneg %p181
        $region18: #{weighted_input_conv.1} parent=11 // pred_check_branch
          %279 = sbr.rel (%p277) target = $region20
        $region19: #{weighted_input_conv.1} parent=11 // pred_region
          _
        $region20: #{weighted_input_conv.1} parent=11 // pred_fallthru
          _
        // Predicated region
        $region21: #{weighted_input_conv.1} parent=11 // pred_check
          %p280 = pneg %p202
        $region22: #{weighted_input_conv.1} parent=11 // pred_check_branch
          %282 = sbr.rel (%p280) target = $region24
        $region23: #{weighted_input_conv.1} parent=11 // pred_region
          _
        $region24: #{weighted_input_conv.1} parent=11 // pred_fallthru
          _
        // Predicated region
        $region25: #{weighted_input_conv.1} parent=11 // pred_check
          %p283 = pneg %p223
        $region26: #{weighted_input_conv.1} parent=11 // pred_check_branch
          %285 = sbr.rel (%p283) target = $region28
        $region27: #{weighted_input_conv.1} parent=11 // pred_region
          _
        $region28: #{weighted_input_conv.1} parent=11 // pred_fallthru
          _
      $region12: #{weighted_input_conv.1} parent=5 // pred_fallthru
        _
      %p286 = scmp.lt.s32.totalorder %s15, 2
      // Predicated region
      $region29: #{weighted_input_conv.1} parent=5 // pred_check
        %p287 = pneg %p286
      $region30: #{weighted_input_conv.1} parent=5 // pred_check_branch
        %289 = sbr.rel (%p287) target = $region32
      $region31: #{weighted_input_conv.1} parent=5 // pred_region
        // Predicated region
        $region33: #{weighted_input_conv.1} parent=31 // pred_check
          %p290 = pneg %p70
        $region34: #{weighted_input_conv.1} parent=31 // pred_check_branch
          %292 = sbr.rel (%p290) target = $region36
        $region35: #{weighted_input_conv.1} parent=31 // pred_region
          %s293 = smul.u32 2, %s23
          %p294 = scmp.lt.s32.totalorder %s22, 1
          %s295 = scalar_select %p294, %s22, 1
          %p296 = scmp.lt.s32.totalorder %s293, 1
          %s297 = scalar_select %p296, %s293, 1
          %s298 = smul.addr %s295, 2
          %s299 = sadd.s32 %s297, %s298
          %s300 = smul.addr %s299, 4
          %s301 = scalar_lea.vmem %s1, %s300
          %s302 = smul.u32 2, %s23
        $region36: #{weighted_input_conv.1} parent=31 // pred_fallthru
          _
        // Predicated region
        $region37: #{weighted_input_conv.1} parent=31 // pred_check
          %p303 = pneg %p98
        $region38: #{weighted_input_conv.1} parent=31 // pred_check_branch
          %305 = sbr.rel (%p303) target = $region40
        $region39: #{weighted_input_conv.1} parent=31 // pred_region
          %s306 = smul.u32 2, %s23
          %p307 = scmp.lt.s32.totalorder %s22, 1
          %s308 = scalar_select %p307, %s22, 1
          %p309 = scmp.lt.s32.totalorder %s306, 1
          %s310 = scalar_select %p309, %s306, 1
          %s311 = smul.addr %s308, 2
          %s312 = sadd.s32 %s310, %s311
          %s313 = smul.addr %s312, 4
          %s314 = scalar_lea.vmem %s2, %s313
          %s315 = smul.u32 2, %s23
        $region40: #{weighted_input_conv.1} parent=31 // pred_fallthru
          _
        // Predicated region
        $region41: #{weighted_input_conv.1} parent=31 // pred_check
          %p316 = pneg %p126
        $region42: #{weighted_input_conv.1} parent=31 // pred_check_branch
          %318 = sbr.rel (%p316) target = $region44
        $region43: #{weighted_input_conv.1} parent=31 // pred_region
          %s319 = sand.u32 %s116, 1
          %s320 = sand.u32 %s116, 1
          %s321 = smul.addr %s320, 8
          %s322 = scalar_lea.vmem [#allocation4], %s321
          %s323 = sadd.s32 %s23, %s22
          %s324 = smul.addr %s323, 4
          %s325 = scalar_lea.vmem %s3, %s324
          // Predicated region
          $region45: #{weighted_input_conv.1} parent=43 // pred_check
            _
          $region46: #{weighted_input_conv.1} parent=43 // pred_check_branch
            %327 = sbr.rel (0) target = $region48
          $region47: #{weighted_input_conv.1} parent=43 // pred_region
            // Predicated region
            $region49: #{weighted_input_conv.1} parent=47 // pred_check
              _
            $region50: #{weighted_input_conv.1} parent=47 // pred_check_branch
              %329 = sbr.rel target = $region52
            $region51: #{weighted_input_conv.1} parent=47 // pred_region
              // Predicated region
              $region64: #{weighted_input_conv.1} parent=51 // pred_check
                _
              $region65: #{weighted_input_conv.1} parent=51 // pred_check_branch
                %347 = sbr.rel (0) target = $region67
              $region66: #{weighted_input_conv.1} parent=51 // pred_region
                loop: start=0, step=1, limit=1
                $region68: #{weighted_input_conv.1} parent=66 // loop_pre_header
                  _
                $region69: #{weighted_input_conv.1} parent=66 // loop_header
                  %s349 = sphi 0, %s353
                  %p350 = scmp.ge.s32.totalorder %s349, 1
                  %s354 = sphi %s325, %s325
                  %s355 = sphi %s322, %s322
                $region70: #{weighted_input_conv.1} parent=66 // loop_header_branch
                  %352 = sbr.rel (%p350) target = $region74
                $region71: #{weighted_input_conv.1} parent=66 // loop_body
                  _
                $region72: #{weighted_input_conv.1} parent=66 // loop_footer
                  %s353 = sadd.s32 1, %s349
                $region73: #{weighted_input_conv.1} parent=66 // loop_footer_branch
                  %348 = sbr.rel target = $region69
                $region74: #{weighted_input_conv.1} parent=66 // loop_exit
                  _
                %s357 = ssub.s32 16, 1
                loop: start=0, step=1, limit=1
                $region75: #{weighted_input_conv.1} parent=66 // loop_pre_header
                  _
                $region76: #{weighted_input_conv.1} parent=66 // loop_header
                  %s359 = sphi 0, %s363
                  %p360 = scmp.ge.s32.totalorder %s359, 1
                  %s364 = sphi %s325, %s325
                  %s365 = sphi %s322, %s322
                $region77: #{weighted_input_conv.1} parent=66 // loop_header_branch
                  %362 = sbr.rel (%p360) target = $region81
                $region78: #{weighted_input_conv.1} parent=66 // loop_body
                  %v366 = vld [vmem:[%s364] sm:%s357]
                  %367 = vst [vmem:[%s365] sm:%s357] %v366
                  %v368 = vld [vmem:[%s364 + $0x8] sm:%s357]
                  %369 = vst [vmem:[%s365 + $0x4] sm:%s357] %v368
                $region79: #{weighted_input_conv.1} parent=66 // loop_footer
                  %s363 = sadd.s32 1, %s359
                $region80: #{weighted_input_conv.1} parent=66 // loop_footer_branch
                  %358 = sbr.rel target = $region76
                $region81: #{weighted_input_conv.1} parent=66 // loop_exit
                  _
              $region67: #{weighted_input_conv.1} parent=51 // pred_fallthru
                _
            $region52: #{weighted_input_conv.1} parent=47 // pred_fallthru
              _
            // Predicated region
            $region53: #{weighted_input_conv.1} parent=47 // pred_check
              _
            $region54: #{weighted_input_conv.1} parent=47 // pred_check_branch
              %331 = sbr.rel (0) target = $region56
            $region55: #{weighted_input_conv.1} parent=47 // pred_region
              %s333 = ssub.s32 16, 1
              loop: start=0, step=1, limit=1
              $region57: #{weighted_input_conv.1} parent=55 // loop_pre_header
                _
              $region58: #{weighted_input_conv.1} parent=55 // loop_header
                %s335 = sphi 0, %s339
                %p336 = scmp.ge.s32.totalorder %s335, 1
                %s340 = sphi %s325, %s325
                %s341 = sphi %s322, %s322
              $region59: #{weighted_input_conv.1} parent=55 // loop_header_branch
                %338 = sbr.rel (%p336) target = $region63
              $region60: #{weighted_input_conv.1} parent=55 // loop_body
                %v342 = vld [vmem:[%s340] sm:%s333]
                %343 = vst [vmem:[%s341] sm:%s333] %v342
                %v344 = vld [vmem:[%s340 + $0x8] sm:%s333]
                %345 = vst [vmem:[%s341 + $0x4] sm:%s333] %v344
              $region61: #{weighted_input_conv.1} parent=55 // loop_footer
                %s339 = sadd.s32 1, %s335
              $region62: #{weighted_input_conv.1} parent=55 // loop_footer_branch
                %334 = sbr.rel target = $region58
              $region63: #{weighted_input_conv.1} parent=55 // loop_exit
                _
            $region56: #{weighted_input_conv.1} parent=47 // pred_fallthru
              _
          $region48: #{weighted_input_conv.1} parent=43 // pred_fallthru
            _
          %370 = vnop
        $region44: #{weighted_input_conv.1} parent=31 // pred_fallthru
          _
        // Predicated region
        $region82: #{weighted_input_conv.1} parent=31 // pred_check
          %p371 = pneg %p154
        $region83: #{weighted_input_conv.1} parent=31 // pred_check_branch
          %373 = sbr.rel (%p371) target = $region85
        $region84: #{weighted_input_conv.1} parent=31 // pred_region
          %s374 = sand.u32 %s144, 1
          %s375 = sand.u32 %s144, 1
          %s376 = smul.addr %s375, 8
          %s377 = scalar_lea.vmem [#allocation5], %s376
          %s378 = sadd.s32 %s23, %s22
          %s379 = smul.addr %s378, 4
          %s380 = scalar_lea.vmem %s4, %s379
          // Predicated region
          $region86: #{weighted_input_conv.1} parent=84 // pred_check
            _
          $region87: #{weighted_input_conv.1} parent=84 // pred_check_branch
            %382 = sbr.rel (0) target = $region89
          $region88: #{weighted_input_conv.1} parent=84 // pred_region
            // Predicated region
            $region90: #{weighted_input_conv.1} parent=88 // pred_check
              _
            $region91: #{weighted_input_conv.1} parent=88 // pred_check_branch
              %384 = sbr.rel target = $region93
            $region92: #{weighted_input_conv.1} parent=88 // pred_region
              // Predicated region
              $region105: #{weighted_input_conv.1} parent=92 // pred_check
                _
              $region106: #{weighted_input_conv.1} parent=92 // pred_check_branch
                %402 = sbr.rel (0) target = $region108
              $region107: #{weighted_input_conv.1} parent=92 // pred_region
                loop: start=0, step=1, limit=1
                $region109: #{weighted_input_conv.1} parent=107 // loop_pre_header
                  _
                $region110: #{weighted_input_conv.1} parent=107 // loop_header
                  %s404 = sphi 0, %s408
                  %p405 = scmp.ge.s32.totalorder %s404, 1
                  %s409 = sphi %s380, %s380
                  %s410 = sphi %s377, %s377
                $region111: #{weighted_input_conv.1} parent=107 // loop_header_branch
                  %407 = sbr.rel (%p405) target = $region115
                $region112: #{weighted_input_conv.1} parent=107 // loop_body
                  _
                $region113: #{weighted_input_conv.1} parent=107 // loop_footer
                  %s408 = sadd.s32 1, %s404
                $region114: #{weighted_input_conv.1} parent=107 // loop_footer_branch
                  %403 = sbr.rel target = $region110
                $region115: #{weighted_input_conv.1} parent=107 // loop_exit
                  _
                %s412 = ssub.s32 16, 1
                loop: start=0, step=1, limit=1
                $region116: #{weighted_input_conv.1} parent=107 // loop_pre_header
                  _
                $region117: #{weighted_input_conv.1} parent=107 // loop_header
                  %s414 = sphi 0, %s418
                  %p415 = scmp.ge.s32.totalorder %s414, 1
                  %s419 = sphi %s380, %s380
                  %s420 = sphi %s377, %s377
                $region118: #{weighted_input_conv.1} parent=107 // loop_header_branch
                  %417 = sbr.rel (%p415) target = $region122
                $region119: #{weighted_input_conv.1} parent=107 // loop_body
                  %v421 = vld [vmem:[%s419] sm:%s412]
                  %422 = vst [vmem:[%s420] sm:%s412] %v421
                  %v423 = vld [vmem:[%s419 + $0x8] sm:%s412]
                  %424 = vst [vmem:[%s420 + $0x4] sm:%s412] %v423
                $region120: #{weighted_input_conv.1} parent=107 // loop_footer
                  %s418 = sadd.s32 1, %s414
                $region121: #{weighted_input_conv.1} parent=107 // loop_footer_branch
                  %413 = sbr.rel target = $region117
                $region122: #{weighted_input_conv.1} parent=107 // loop_exit
                  _
              $region108: #{weighted_input_conv.1} parent=92 // pred_fallthru
                _
            $region93: #{weighted_input_conv.1} parent=88 // pred_fallthru
              _
            // Predicated region
            $region94: #{weighted_input_conv.1} parent=88 // pred_check
              _
            $region95: #{weighted_input_conv.1} parent=88 // pred_check_branch
              %386 = sbr.rel (0) target = $region97
            $region96: #{weighted_input_conv.1} parent=88 // pred_region
              %s388 = ssub.s32 16, 1
              loop: start=0, step=1, limit=1
              $region98: #{weighted_input_conv.1} parent=96 // loop_pre_header
                _
              $region99: #{weighted_input_conv.1} parent=96 // loop_header
                %s390 = sphi 0, %s394
                %p391 = scmp.ge.s32.totalorder %s390, 1
                %s395 = sphi %s380, %s380
                %s396 = sphi %s377, %s377
              $region100: #{weighted_input_conv.1} parent=96 // loop_header_branch
                %393 = sbr.rel (%p391) target = $region104
              $region101: #{weighted_input_conv.1} parent=96 // loop_body
                %v397 = vld [vmem:[%s395] sm:%s388]
                %398 = vst [vmem:[%s396] sm:%s388] %v397
                %v399 = vld [vmem:[%s395 + $0x8] sm:%s388]
                %400 = vst [vmem:[%s396 + $0x4] sm:%s388] %v399
              $region102: #{weighted_input_conv.1} parent=96 // loop_footer
                %s394 = sadd.s32 1, %s390
              $region103: #{weighted_input_conv.1} parent=96 // loop_footer_branch
                %389 = sbr.rel target = $region99
              $region104: #{weighted_input_conv.1} parent=96 // loop_exit
                _
            $region97: #{weighted_input_conv.1} parent=88 // pred_fallthru
              _
          $region89: #{weighted_input_conv.1} parent=84 // pred_fallthru
            _
          %425 = vnop
        $region85: #{weighted_input_conv.1} parent=31 // pred_fallthru
          _
      $region32: #{weighted_input_conv.1} parent=5 // pred_fallthru
        _
      %p426 = scmp.le.s32.totalorder 1, %s15
      %p427 = scmp.lt.s32.totalorder %s15, 3
      %p428 = pnand %p426, %p427
      %p429 = pneg %p428
      // Predicated region
      $region123: #{weighted_input_conv.1} parent=5 // pred_check
        _
      $region124: #{weighted_input_conv.1} parent=5 // pred_check_branch
        %431 = sbr.rel (%p428) target = $region126
      $region125: #{weighted_input_conv.1} parent=5 // pred_region
        %s432 = ssub.s32 %s15, 1
        // Predicated region
        $region127: #{weighted_input_conv.1} parent=125 // pred_check
          %p433 = pneg %p48
        $region128: #{weighted_input_conv.1} parent=125 // pred_check_branch
          %435 = sbr.rel (%p433) target = $region130
        $region129: #{weighted_input_conv.1} parent=125 // pred_region
          %436 = dma.done [#allocation3], 16
        $region130: #{weighted_input_conv.1} parent=125 // pred_fallthru
          _
        %s437 = sand.u32 %s119, 1
        %s438 = sand.u32 %s119, 1
        %s439 = smul.addr %s438, 8
        %s440 = scalar_lea.vmem [#allocation4], %s439
        // Predicated region
        $region131: #{weighted_input_conv.1} parent=125 // pred_check
          %p441 = pneg %p132
        $region132: #{weighted_input_conv.1} parent=125 // pred_check_branch
          %443 = sbr.rel (%p441) target = $region134
        $region133: #{weighted_input_conv.1} parent=125 // pred_region
          _
        $region134: #{weighted_input_conv.1} parent=125 // pred_fallthru
          _
        %s444 = sand.u32 %s147, 1
        %s445 = sand.u32 %s147, 1
        %s446 = smul.addr %s445, 8
        %s447 = scalar_lea.vmem [#allocation5], %s446
        // Predicated region
        $region135: #{weighted_input_conv.1} parent=125 // pred_check
          %p448 = pneg %p160
        $region136: #{weighted_input_conv.1} parent=125 // pred_check_branch
          %450 = sbr.rel (%p448) target = $region138
        $region137: #{weighted_input_conv.1} parent=125 // pred_region
          _
        $region138: #{weighted_input_conv.1} parent=125 // pred_fallthru
          _
        %451 = sfence
        %p452 = pneg %p48
        %p453 = pneg %p45
        %s454 = smul.u32 2, %s25
        %p455 = scmp.lt.s32.totalorder %s24, 1
        %s456 = scalar_select %p455, %s24, 1
        %p457 = scmp.lt.s32.totalorder %s454, 1
        %s458 = scalar_select %p457, %s454, 1
        %s459 = smul.addr %s456, 2
        %s460 = sadd.s32 %s458, %s459
        %s461 = smul.addr %s460, 4
        %s462 = scalar_lea.vmem %s1, %s461
        %p463 = pneg %p76
        %p464 = pneg %p73
        %s465 = smul.u32 2, %s25
        %p466 = scmp.lt.s32.totalorder %s24, 1
        %s467 = scalar_select %p466, %s24, 1
        %p468 = scmp.lt.s32.totalorder %s465, 1
        %s469 = scalar_select %p468, %s465, 1
        %s470 = smul.addr %s467, 2
        %s471 = sadd.s32 %s469, %s470
        %s472 = smul.addr %s471, 4
        %s473 = scalar_lea.vmem %s2, %s472
        %p474 = pneg %p104
        %p475 = pneg %p101
        %s476 = sand.u32 %s119, 1
        %s477 = sand.u32 %s119, 1
        %s478 = smul.addr %s477, 8
        %s479 = scalar_lea.vmem [#allocation4], %s478
        %p480 = pneg %p132
        %p481 = pneg %p129
        %s482 = sand.u32 %s147, 1
        %s483 = sand.u32 %s147, 1
        %s484 = smul.addr %s483, 8
        %s485 = scalar_lea.vmem [#allocation5], %s484
        %p486 = pneg %p160
        %p487 = pneg %p157
        %p488 = pneg %p181
        %p489 = pneg %p178
        %p490 = pneg %p202
        %p491 = pneg %p199
        %p492 = pneg %p223
        %p493 = pneg %p220
        %p494 = pneg %p251
        %p495 = pneg %p248
        %s496 = smul.u32 2, %s25
        %p497 = scmp.lt.s32.totalorder %s24, 1
        %s498 = scalar_select %p497, %s24, 1
        %p499 = scmp.lt.s32.totalorder %s496, 1
        %s500 = scalar_select %p499, %s496, 1
        %s501 = smul.addr %s498, 2
        %s502 = sadd.s32 %s500, %s501
        %s503 = smul.addr %s502, 8
        %s504 = scalar_lea.vmem %s8, %s503
        %s505 = smul.u32 2, %s25
        %p506 = scmp.lt.s32.totalorder %s24, 1
        %s507 = scalar_select %p506, %s24, 1
        %p508 = scmp.lt.s32.totalorder %s505, 1
        %s509 = scalar_select %p508, %s505, 1
        %s510 = smul.addr %s507, 2
        %s511 = sadd.s32 %s509, %s510
        %s512 = smul.addr %s511, 4
        %s513 = scalar_lea.vmem %s1, %s512
        %s514 = smul.u32 2, %s25
        %s515 = smul.u32 2, %s25
        %p516 = scmp.lt.s32.totalorder %s24, 1
        %s517 = scalar_select %p516, %s24, 1
        %p518 = scmp.lt.s32.totalorder %s515, 1
        %s519 = scalar_select %p518, %s515, 1
        %s520 = smul.addr %s517, 2
        %s521 = sadd.s32 %s519, %s520
        %s522 = smul.addr %s521, 4
        %s523 = scalar_lea.vmem %s2, %s522
        %s524 = smul.u32 2, %s25
        %s525 = smul.u32 2, %s25
        %p526 = scmp.lt.s32.totalorder %s24, 1
        %s527 = scalar_select %p526, %s24, 1
        %p528 = scmp.lt.s32.totalorder %s525, 1
        %s529 = scalar_select %p528, %s525, 1
        %s530 = smul.addr %s527, 2
        %s531 = sadd.s32 %s529, %s530
        %s532 = smul.addr %s531, 8
        %s533 = scalar_lea.vmem %s8, %s532
        %s534 = smul.u32 2, %s25
        %s535 = sld [smem:[#allocation2]]
        %v536 = vld [vmem:[%s513] sm:$0xff]
        %v537 = vstv %s535
        %v538 = vmul.f32 %v537, %v536
        %v539 = vld [vmem:[%s440] sm:$0xf]
        %v540 = vmul.f32 %v537, %v539
        %v541 = vld [vmem:[%s447] sm:$0xf]
        %v542 = vmul.f32 %v537, %v541
        %s543 = sld [smem:[#allocation2 + $0x1]]
        %v544 = vld [vmem:[%s523] sm:$0xff]
        %v545 = vstv %s543
        %v546 = vmul.f32 %v545, %v544
        %v547 = vadd.f32 %v538, %v546
        %s548 = scalar_lea.vmem %s440, 4 [#allocation4]
        %v549 = vld [vmem:[%s548] sm:$0xf]
        %v550 = vmul.f32 %v545, %v549
        %v551 = vadd.f32 %v540, %v550
        %s552 = scalar_lea.vmem %s447, 4 [#allocation5]
        %v553 = vld [vmem:[%s552] sm:$0xf]
        %v554 = vmul.f32 %v545, %v553
        %v555 = vadd.f32 %v542, %v554
        %v556 = vmax.f32 %v547, 0.0
        %v557 = vmax.f32 %v551, 0.0
        %v558 = vmax.f32 %v555, 0.0
        %v560 = vcombine.high %v556, %v556
        %563 = vrot.lane.b32.xlu0 %v557, 112
        %v564 = vpop.permute.xlu0 %563
        %vm566 = vcmask 130048
        %v567 = vsel %vm566, %v558, 0.0
        %vm568 = vcmask 916480
        %v569 = vsel %vm568, 0.0, %v564
        %v570 = vlaneseq
        %v571 = vand.u32 %v570, 127
        %v572 = vadd.s32 %v571, 128
        %v573 = vadd.s32 %v571, 256
        %v574 = vadd.s32 %v571, 384
        %vm575 = vcmp.ge.s32.totalorder %v571, 496
        %vm576 = vcmp.ge.s32.totalorder %v572, 496
        %vm577 = vcmp.ge.s32.totalorder %v573, 496
        %vm578 = vcmp.ge.s32.totalorder %v574, 496
        %v579 = vsub.s32 %v571, 496
        %v580 = vsub.s32 %v572, 496
        %v581 = vsub.s32 %v573, 496
        %v582 = vsub.s32 %v574, 496
        %vm583 = vcmp.lt.s32.totalorder %v571, 0
        %v584 = vsub.s32 0, %v571
        %v585 = vsel %vm583, %v584, %v571
        %v586 = vshrl.u32 %v585, 4
        %v587 = vand.u32 %v585, 15
        %v588 = vsub.s32 0, %v587
        %v589 = vsel %vm583, %v588, %v587
        %vm590 = vcmp.lt.s32.totalorder %v572, 0
        %v591 = vsub.s32 0, %v572
        %v592 = vsel %vm590, %v591, %v572
        %v593 = vshrl.u32 %v592, 4
        %v594 = vand.u32 %v592, 15
        %v595 = vsub.s32 0, %v594
        %v596 = vsel %vm590, %v595, %v594
        %vm597 = vcmp.lt.s32.totalorder %v573, 0
        %v598 = vsub.s32 0, %v573
        %v599 = vsel %vm597, %v598, %v573
        %v600 = vshrl.u32 %v599, 4
        %v601 = vand.u32 %v599, 15
        %v602 = vsub.s32 0, %v601
        %v603 = vsel %vm597, %v602, %v601
        %vm604 = vcmp.lt.s32.totalorder %v574, 0
        %v605 = vsub.s32 0, %v574
        %v606 = vsel %vm604, %v605, %v574
        %v607 = vshrl.u32 %v606, 4
        %v608 = vand.u32 %v606, 15
        %v609 = vsub.s32 0, %v608
        %v610 = vsel %vm604, %v609, %v608
        %vm611 = vcmp.ne.s32.totalorder %v589, 0
        %vm612 = vcmp.ne.s32.totalorder %v596, 0
        %vm613 = vcmp.ne.s32.totalorder %v603, 0
        %vm614 = vcmp.ne.s32.totalorder %v610, 0
        %vm615 = vcmp.lt.s32.totalorder %v589, 0
        %vm616 = vcmp.lt.s32.totalorder %v596, 0
        %vm617 = vcmp.lt.s32.totalorder %v603, 0
        %vm618 = vcmp.lt.s32.totalorder %v610, 0
        %vm619 = vmand %vm615, %vm611
        %vm620 = vmand %vm616, %vm612
        %vm621 = vmand %vm617, %vm613
        %vm622 = vmand %vm618, %vm614
        %v623 = vadd.s32 %v589, 16
        %v624 = vadd.s32 %v596, 16
        %v625 = vadd.s32 %v603, 16
        %v626 = vadd.s32 %v610, 16
        %v627 = vsel %vm619, %v623, %v589
        %v628 = vsel %vm620, %v624, %v596
        %v629 = vsel %vm621, %v625, %v603
        %v630 = vsel %vm622, %v626, %v610
        %v631 = vsel %vm575, %v579, %v627
        %v632 = vsel %vm576, %v580, %v628
        %v633 = vsel %vm577, %v581, %v629
        %v634 = vsel %vm578, %v582, %v630
        %vm635 = vcmp.ne.s32.totalorder %v631, 0
        %vm636 = vcmp.ne.s32.totalorder %v632, 0
        %vm637 = vcmp.ne.s32.totalorder %v633, 0
        %vm638 = vcmp.ne.s32.totalorder %v634, 0
        %639 = vrot.lane.b32.xlu0 %v556, 1
        %v640 = vpop.permute.xlu0 %639
        %641 = vrot.lane.b32.xlu0 %v560, 1
        %v642 = vpop.permute.xlu0 %641
        %643 = vrot.lane.b32.xlu0 %v567, 1
        %v644 = vpop.permute.xlu0 %643
        %645 = vrot.lane.b32.xlu0 %v569, 1
        %v646 = vpop.permute.xlu0 %645
        %vm647 = vcmp.lt.s32.totalorder %v571, 1
        %v648 = vsel %vm647, %v644, %v646
        %v649 = vsel %vm647, %v642, %v644
        %v650 = vsel %vm647, %v640, %v642
        %v651 = vsel %vm647, %v646, %v640
        %v652 = vsel %vm635, 1, 0
        %v653 = vsel %vm636, 1, 0
        %v654 = vsel %vm637, 1, 0
        %v655 = vsel %vm638, 1, 0
        %vm656 = vcmp.eq.s32.totalorder %v652, 1
        %vm657 = vcmp.eq.s32.totalorder %v653, 1
        %vm658 = vcmp.eq.s32.totalorder %v654, 1
        %vm659 = vcmp.eq.s32.totalorder %v655, 1
        %v660 = vsel %vm656, %v651, 0.0
        %v661 = vsel %vm657, %v650, 0.0
        %v662 = vsel %vm658, %v649, 0.0
        %v663 = vsel %vm659, %v648, 0.0
        %vm664 = vcmp.ne.s32.totalorder %v631, 15
        %vm665 = vcmp.ne.s32.totalorder %v632, 15
        %vm666 = vcmp.ne.s32.totalorder %v633, 15
        %vm667 = vcmp.ne.s32.totalorder %v634, 15
        %668 = vrot.lane.b32.xlu0 %v556, 127
        %v669 = vpop.permute.xlu0 %668
        %670 = vrot.lane.b32.xlu0 %v560, 127
        %v671 = vpop.permute.xlu0 %670
        %672 = vrot.lane.b32.xlu0 %v567, 127
        %v673 = vpop.permute.xlu0 %672
        %674 = vrot.lane.b32.xlu0 %v569, 127
        %v675 = vpop.permute.xlu0 %674
        %vm676 = vcmp.lt.s32.totalorder %v571, 127
        %v677 = vsel %vm676, %v673, %v675
        %v678 = vsel %vm676, %v671, %v673
        %v679 = vsel %vm676, %v669, %v671
        %v680 = vsel %vm676, %v675, %v669
        %v681 = vsel %vm664, 1, 0
        %v682 = vsel %vm665, 1, 0
        %v683 = vsel %vm666, 1, 0
        %v684 = vsel %vm667, 1, 0
        %vm685 = vcmp.eq.s32.totalorder %v681, 1
        %vm686 = vcmp.eq.s32.totalorder %v682, 1
        %vm687 = vcmp.eq.s32.totalorder %v683, 1
        %vm688 = vcmp.eq.s32.totalorder %v684, 1
        %v689 = vsel %vm685, %v679, 0.0
        %v690 = vsel %vm686, %v678, 0.0
        %v691 = vsel %vm687, %v677, 0.0
        %v692 = vsel %vm688, %v680, 0.0
        %v693 = vld [vmem:[%s5] sm:$0xf]
        %695 = vset.pattern.permute.xlu0 3
        %696 = vperm.xlu0 %695, %v693
        %v697 = vpop.permute.xlu0 %696
        %v699 = vmul.f32 %v697, %v660
        %v700 = vmul.f32 %v697, %v661
        %701 = vset.pattern.permute.xlu0 4
        %702 = vperm.xlu0 %701, %v693
        %v703 = vpop.permute.xlu0 %702
        %v705 = vmul.f32 %v703, %v556
        %v706 = vmul.f32 %v703, %v560
        %v707 = vadd.f32 %v699, %v705
        %v708 = vadd.f32 %v700, %v706
        %709 = vset.pattern.permute.xlu0 5
        %710 = vperm.xlu0 %709, %v693
        %v711 = vpop.permute.xlu0 %710
        %v713 = vmul.f32 %v711, %v689
        %v714 = vmul.f32 %v711, %v690
        %v715 = vadd.f32 %v707, %v713
        %v716 = vadd.f32 %v708, %v714
        %717 = vset.pattern.permute.xlu0 0
        %718 = vperm.xlu0 %717, %v693
        %v719 = vpop.permute.xlu0 %718
        %v721 = vmul.f32 %v719, %v660
        %v722 = vmul.f32 %v719, %v661
        %v723 = vmul.f32 %v719, %v663
        %724 = vset.pattern.permute.xlu0 1
        %725 = vperm.xlu0 %724, %v693
        %v726 = vpop.permute.xlu0 %725
        %v728 = vmul.f32 %v726, %v556
        %v729 = vmul.f32 %v726, %v560
        %v730 = vmul.f32 %v726, %v569
        %v731 = vadd.f32 %v721, %v728
        %v732 = vadd.f32 %v722, %v729
        %v733 = vadd.f32 %v723, %v730
        %734 = vset.pattern.permute.xlu0 2
        %735 = vperm.xlu0 %734, %v693
        %v736 = vpop.permute.xlu0 %735
        %v738 = vmul.f32 %v736, %v689
        %v739 = vmul.f32 %v736, %v690
        %v740 = vmul.f32 %v736, %v692
        %v741 = vadd.f32 %v731, %v738
        %v742 = vadd.f32 %v732, %v739
        %v743 = vadd.f32 %v733, %v740
        %744 = vrot.lane.b32.xlu0 %v741, 16
        %v745 = vpop.permute.xlu0 %744
        %746 = vrot.lane.b32.xlu0 %v742, 16
        %v747 = vpop.permute.xlu0 %746
        %748 = vrot.lane.b32.xlu0 %v743, 16
        %v749 = vpop.permute.xlu0 %748
        %vm750 = vcmp.lt.s32.totalorder %v571, 16
        %v751 = vsel %vm750, %v745, %v747
        %v752 = vsel %vm750, %v749, %v745
        %v753 = vadd.f32 %v715, %v752
        %v754 = vadd.f32 %v716, %v751
        %755 = vset.pattern.permute.xlu0 6
        %756 = vperm.xlu0 %755, %v693
        %v757 = vpop.permute.xlu0 %756
        %v759 = vmul.f32 %v757, %v660
        %v760 = vmul.f32 %v757, %v661
        %v761 = vmul.f32 %v757, %v662
        %762 = vset.pattern.permute.xlu0 7
        %763 = vperm.xlu0 %762, %v693
        %v764 = vpop.permute.xlu0 %763
        %v766 = vmul.f32 %v764, %v556
        %v767 = vmul.f32 %v764, %v560
        %v768 = vmul.f32 %v764, %v567
        %v769 = vadd.f32 %v759, %v766
        %v770 = vadd.f32 %v760, %v767
        %v771 = vadd.f32 %v761, %v768
        %772 = vset.pattern.permute.xlu0 8
        %773 = vperm.xlu0 %772, %v693
        %v774 = vpop.permute.xlu0 %773
        %v776 = vmul.f32 %v774, %v689
        %v777 = vmul.f32 %v774, %v690
        %v778 = vmul.f32 %v774, %v691
        %v779 = vadd.f32 %v769, %v776
        %v780 = vadd.f32 %v770, %v777
        %v781 = vadd.f32 %v771, %v778
        %782 = vrot.lane.b32.xlu0 %v779, 112
        %v783 = vpop.permute.xlu0 %782
        %784 = vrot.lane.b32.xlu0 %v780, 112
        %v785 = vpop.permute.xlu0 %784
        %786 = vrot.lane.b32.xlu0 %v781, 112
        %v787 = vpop.permute.xlu0 %786
        %vm788 = vcmp.lt.s32.totalorder %v571, 112
        %v789 = vsel %vm788, %v785, %v787
        %v790 = vsel %vm788, %v783, %v785
        %v791 = vadd.f32 %v753, %v790
        %v792 = vadd.f32 %v754, %v789
        %v793 = vld [vmem:[%s6] sm:$0xff]
        %v794 = vld [vmem:[%s7] sm:$0xff]
        %796 = vset.pattern.permute.xlu0 0
        %797 = vperm.xlu0 %796, %v794
        %v798 = vpop.permute.xlu0 %797
        %vm800 = vcmask 31744
        %v802 = vsel %vm800, %v793, 0
        %vm804 = vcmask 1043456
        %v806 = vsel %vm804, %v791, 0
        %v809 = vsel %vm804, %v792, 0
        %811 = vmatprep.subr.mxu0 0.0
        %812 = vmatpush1.msra.mxu0 0.0
        %813 = vmatprep.subr.mxu0 0.0
        %814 = vmatpush1.msra.mxu0 0.0
        %815 = vmatprep.subr.mxu0 0.0
        %816 = vmatpush1.msra.mxu0 0.0
        %817 = vmatprep.subr.mxu0 0.0
        %818 = vmatpush1.msra.mxu0 0.0
        %819 = vmatprep.subr.mxu0 0.0
        %820 = vmatpush1.msra.mxu0 0.0
        %821 = vmatprep.subr.mxu0 0.0
        %822 = vmatpush1.msra.mxu0 0.0
        %823 = vmatprep.subr.mxu0 0.0
        %824 = vmatpush1.msra.mxu0 0.0
        %825 = vmatprep.subr.mxu0 0.0
        %826 = vmatpush1.msra.mxu0 0.0
        %827 = vmatprep.subr.mxu0 0.0
        %828 = vmatpush1.msra.mxu0 0.0
        %829 = vmatprep.subr.mxu0 0.0
        %830 = vmatpush1.msra.mxu0 0.0
        %831 = vmatprep.subr.mxu0 0.0
        %832 = vmatpush1.msra.mxu0 0.0
        %833 = vmatprep.subr.mxu0 0.0
        %834 = vmatpush1.msra.mxu0 0.0
        %835 = vmatprep.subr.mxu0 0.0
        %836 = vmatpush1.msra.mxu0 0.0
        %837 = vmatprep.subr.mxu0 0.0
        %838 = vmatpush1.msra.mxu0 0.0
        %839 = vmatprep.subr.mxu0 0.0
        %840 = vmatpush1.msra.mxu0 0.0
        %841 = vmatprep.subr.mxu0 %v809
        %842 = vmatpush1.msra.mxu0 %v806
        %843 = vmatprep.subr.mxu0 0.0
        %844 = vmatpush2.msra.mxu0 0.0
        %845 = vmatprep.subr.mxu0 0.0
        %846 = vmatpush2.msra.mxu0 0.0
        %847 = vmatprep.subr.mxu0 0.0
        %848 = vmatpush2.msra.mxu0 0.0
        %849 = vmatprep.subr.mxu0 0.0
        %850 = vmatpush2.msra.mxu0 0.0
        %851 = vmatprep.subr.mxu0 0.0
        %852 = vmatpush2.msra.mxu0 0.0
        %853 = vmatprep.subr.mxu0 0.0
        %854 = vmatpush2.msra.mxu0 0.0
        %855 = vmatprep.subr.mxu0 0.0
        %856 = vmatpush2.msra.mxu0 0.0
        %857 = vmatprep.subr.mxu0 0.0
        %858 = vmatpush2.msra.mxu0 0.0
        %859 = vmatprep.subr.mxu0 0.0
        %860 = vmatpush2.msra.mxu0 0.0
        %861 = vmatprep.subr.mxu0 0.0
        %862 = vmatpush2.msra.mxu0 0.0
        %863 = vmatprep.subr.mxu0 0.0
        %864 = vmatpush2.msra.mxu0 0.0
        %865 = vmatprep.subr.mxu0 0.0
        %866 = vmatpush2.msra.mxu0 0.0
        %867 = vmatprep.subr.mxu0 0.0
        %868 = vmatpush2.msra.mxu0 0.0
        %869 = vmatprep.subr.mxu0 0.0
        %870 = vmatpush2.msra.mxu0 0.0
        %871 = vmatprep.subr.mxu0 0.0
        %872 = vmatpush2.msra.mxu0 0.0
        %873 = vmatprep.subr.mxu0 0.0
        %874 = vmatpush2.msra.mxu0 0.0
        %875 = vmatprep.mubr.f32.mxu0 0.0
        %876 = vmatmul.mubr.f32.gmra.mxu0 %v802
        %v877 = vpop.f32.mrf.mxu0
        %v878 = vadd.f32 %v798, %v877
        %v879 = vpop.f32.mrf.mxu0
        %v880 = vadd.f32 %v798, %v879
        %881 = vdwg.mxu0
        %v882 = vmax.f32 %v878, 0.0
        %v883 = vmax.f32 %v880, 0.0
        %884 = vst [vmem:[%s533] sm:$0xff] %v882
        %885 = vst [vmem:[%s533 + $0x8] sm:$0xff] %v883
        %s886 = smul.u32 2, %s25
        %p887 = scmp.lt.s32.totalorder %s24, 1
        %s888 = scalar_select %p887, %s24, 1
        %p889 = scmp.lt.s32.totalorder %s886, 1
        %s890 = scalar_select %p889, %s886, 1
        %s891 = smul.addr %s888, 2
        %s892 = sadd.s32 %s890, %s891
        %s893 = smul.addr %s892, 8
        %s894 = scalar_lea.vmem %s8, %s893
        // Predicated region
        $region139: #{weighted_input_conv.1} parent=125 // pred_check
          %p895 = pneg %p248
        $region140: #{weighted_input_conv.1} parent=125 // pred_check_branch
          %897 = sbr.rel (%p895) target = $region142
        $region141: #{weighted_input_conv.1} parent=125 // pred_region
          %s898 = smul.u32 2, %s25
        $region142: #{weighted_input_conv.1} parent=125 // pred_fallthru
          _
      $region126: #{weighted_input_conv.1} parent=5 // pred_fallthru
        _
      %p899 = scmp.le.s32.totalorder 2, %s15
      // Predicated region
      $region143: #{weighted_input_conv.1} parent=5 // pred_check
        %p900 = pneg %p899
      $region144: #{weighted_input_conv.1} parent=5 // pred_check_branch
        %902 = sbr.rel (%p900) target = $region146
      $region145: #{weighted_input_conv.1} parent=5 // pred_region
        %s903 = ssub.s32 %s15, 2
        // Predicated region
        $region147: #{weighted_input_conv.1} parent=145 // pred_check
          %p904 = pneg %p254
        $region148: #{weighted_input_conv.1} parent=145 // pred_check_branch
          %906 = sbr.rel (%p904) target = $region150
        $region149: #{weighted_input_conv.1} parent=145 // pred_region
          %s907 = smul.u32 2, %s27
          %p908 = scmp.lt.s32.totalorder %s26, 1
          %s909 = scalar_select %p908, %s26, 1
          %p910 = scmp.lt.s32.totalorder %s907, 1
          %s911 = scalar_select %p910, %s907, 1
          %s912 = smul.addr %s909, 2
          %s913 = sadd.s32 %s911, %s912
          %s914 = smul.addr %s913, 8
          %s915 = scalar_lea.vmem %s8, %s914
        $region150: #{weighted_input_conv.1} parent=145 // pred_fallthru
          _
      $region146: #{weighted_input_conv.1} parent=5 // pred_fallthru
        _
    $region6: #{weighted_input_conv.1} parent=1 // loop_footer
      %s19 = sadd.s32 1, %s15
    $region7: #{weighted_input_conv.1} parent=1 // loop_footer_branch
      %14 = sbr.rel target = $region3
    $region8: #{weighted_input_conv.1} parent=1 // loop_exit
      _
    %916 = vsyncpa [#allocation3], 1
    %s917 = scalar_lea.sflag [#allocation3], 1
    %918 = vsyncpa %s917, 1

</llo_original>
